<compile_context>
chip_gen: v7x
topology: tpu7x:2x2x1
jax: 0.10.0
libtpu: 0.0.40
codegen_flags: <defaults>
</compile_context>

<pallas_src>
import functools

import jax
import jax.numpy as jnp
from jax.experimental import pallas as pl
from jax.experimental.pallas import tpu as pltpu

LN_EPS = 1e-5   # PyTorch nn.LayerNorm default
LANE = 128      # TPU vreg lane width
SUBLANE = 8     # TPU vreg sublane count (f32)


def _round_up(n, m):
    return ((n + m - 1) // m) * m


def _mlp_kernel(x_ref, w1_ref, b1_ref, g_ref, beta_ref, w2_ref, b2_ref, o_ref,
                *, h_dim, needs_mask):
    """One batch tile: layer1 -> tanh -> LayerNorm(over real h_dim) -> layer2."""
    # ---- layer1: (tb, in_dim) @ (in_dim, h_pad) on the MXU, f32 accumulation ----
    h = jnp.dot(x_ref[...], w1_ref[...], preferred_element_type=jnp.float32)
    h = h + b1_ref[...]              # (tb, h_pad) + (1, h_pad); padded lanes stay 0
    h = jnp.tanh(h)                  # EUP slot; tanh(0) == 0 keeps padded lanes 0

    # ---- LayerNorm over the real h_dim lanes (lanes >= h_dim are exactly zero) ----
    inv_n = jnp.float32(1.0 / h_dim)
    mean = jnp.sum(h, axis=-1, keepdims=True) * inv_n        # zero pad lanes don't bias the sum
    centered = h - mean
    sq = centered * centered
    if needs_mask:
        # pad lanes of `centered` are -mean (non-zero): mask them out of the variance
        lane_id = jax.lax.broadcasted_iota(jnp.int32, h.shape, dimension=1)
        sq = jnp.where(lane_id < h_dim, sq, 0.0)
    var = jnp.sum(sq, axis=-1, keepdims=True) * inv_n
    normed = centered * jax.lax.rsqrt(var + LN_EPS)
    h_ln = normed * g_ref[...] + beta_ref[...]   # gamma/beta zero-padded -> pad lanes are 0

    # ---- layer2: (tb, h_pad) @ (h_pad, out_pad) on the MXU ----
    out = jnp.dot(h_ln.astype(w2_ref.dtype), w2_ref[...],
                  preferred_element_type=jnp.float32)
    out = out + b2_ref[...]
    o_ref[...] = out.astype(o_ref.dtype)         # lane-dense (out_pad % 128 == 0) store


@functools.partial(jax.jit, static_argnames=("block_b", "matmul_dtype"))
def mlp_forward(x, w1, b1, gamma, beta, w2, b2, *, block_b=256,
                matmul_dtype=jnp.float32):
    """Fused MLP forward.  w1: (in_dim, h_dim), w2: (h_dim, out_dim)."""
    B, in_dim = x.shape
    h_dim = w1.shape[1]
    out_dim = w2.shape[1]

    # --- batch tile & lane-density padding (done once, sliced off at the end) ---
    h_pad = _round_up(h_dim, LANE)
    out_pad = _round_up(out_dim, LANE)
    tb = _round_up(min(block_b, _round_up(B, SUBLANE)), SUBLANE)
    B_pad = _round_up(B, tb)

    xp = x if B_pad == B else jnp.pad(x, ((0, B_pad - B), (0, 0)))
    xp = xp.astype(matmul_dtype)

    dh, do = h_pad - h_dim, out_pad - out_dim
    w1p = jnp.pad(w1, ((0, 0), (0, dh))).astype(matmul_dtype)
    b1p = jnp.pad(b1.reshape(1, -1), ((0, 0), (0, dh))).astype(jnp.float32)
    gp = jnp.pad(gamma.reshape(1, -1), ((0, 0), (0, dh))).astype(jnp.float32)
    bep = jnp.pad(beta.reshape(1, -1), ((0, 0), (0, dh))).astype(jnp.float32)
    w2p = jnp.pad(w2, ((0, dh), (0, do))).astype(matmul_dtype)
    b2p = jnp.pad(b2.reshape(1, -1), ((0, 0), (0, do))).astype(jnp.float32)

    grid = (B_pad // tb,)

    # --- explicit VMEM budget: 2x-buffered x/out tiles + resident weights/params
    #     + headroom; never below the 32 MiB default, capped at v7x's 64 MiB/TC. ---
    mm_bytes = jnp.dtype(matmul_dtype).itemsize
    need = (2 * tb * (in_dim * mm_bytes + out_pad * 4)            # x / out tiles
            + 2 * (in_dim * h_pad + h_pad * out_pad) * mm_bytes   # weights (conservative 2x)
            + 2 * (3 * h_pad + out_pad) * 4)                      # bias / LN rows
    vmem_limit = int(min(max(need + (8 << 20), 32 << 20), 64 << 20))

    out_padded = pl.pallas_call(
        functools.partial(_mlp_kernel, h_dim=h_dim, needs_mask=(h_pad != h_dim)),
        out_shape=jax.ShapeDtypeStruct((B_pad, out_pad), x.dtype),
        grid_spec=pltpu.PrefetchScalarGridSpec(
            num_scalar_prefetch=0,
            grid=grid,
            in_specs=[
                pl.BlockSpec((tb, in_dim), lambda i: (i, 0)),      # x tile
                pl.BlockSpec((in_dim, h_pad), lambda i: (0, 0)),   # w1 (resident)
                pl.BlockSpec((1, h_pad), lambda i: (0, 0)),        # b1
                pl.BlockSpec((1, h_pad), lambda i: (0, 0)),        # gamma
                pl.BlockSpec((1, h_pad), lambda i: (0, 0)),        # beta
                pl.BlockSpec((h_pad, out_pad), lambda i: (0, 0)),  # w2 (resident)
                pl.BlockSpec((1, out_pad), lambda i: (0, 0)),      # b2
            ],
            out_specs=pl.BlockSpec((tb, out_pad), lambda i: (i, 0)),
        ),
        compiler_params=pltpu.CompilerParams(
            dimension_semantics=("parallel",),   # batch axis shards across TCs on v7x
            vmem_limit_bytes=vmem_limit,
        ),
    )(xp, w1p, b1p, gp, bep, w2p, b2p)

    return out_padded[:B, :out_dim]


def mlp_reference(x, w1, b1, gamma, beta, w2, b2):
    h = jnp.tanh(x @ w1 + b1.reshape(1, -1))
    mean = jnp.mean(h, axis=-1, keepdims=True)
    var = jnp.mean((h - mean) ** 2, axis=-1, keepdims=True)
    h = (h - mean) / jnp.sqrt(var + LN_EPS) * gamma.reshape(1, -1) + beta.reshape(1, -1)
    return h @ w2 + b2.reshape(1, -1)


if __name__ == "__main__":
    # Small shapes consistent with the module's (batch, in_dim) input.
    # B=20 is intentionally not tile-aligned to exercise the ragged-batch padding.
    B, in_dim, h_dim, out_dim = 20, 32, 64, 16

    key = jax.random.PRNGKey(0)
    kx, kw1, kb1, kw2, kb2 = jax.random.split(key, 5)

    x = jax.random.normal(kx, (B, in_dim), dtype=jnp.float32)

    lim1 = 1.0 / (in_dim ** 0.5)
    w1 = jax.random.uniform(kw1, (in_dim, h_dim), jnp.float32, -lim1, lim1)
    b1 = jax.random.uniform(kb1, (h_dim,), jnp.float32, -lim1, lim1)

    gamma = jnp.ones((h_dim,), jnp.float32)   # nn.LayerNorm weight init
    beta = jnp.zeros((h_dim,), jnp.float32)   # nn.LayerNorm bias init

    lim2 = 1.0 / (h_dim ** 0.5)
    w2 = jax.random.uniform(kw2, (h_dim, out_dim), jnp.float32, -lim2, lim2)
    b2 = jax.random.uniform(kb2, (out_dim,), jnp.float32, -lim2, lim2)

    ref = mlp_reference(x, w1, b1, gamma, beta, w2, b2)

    # f32 matmul path: strict numerical check.
    out = mlp_forward(x, w1, b1, gamma, beta, w2, b2)
    out = jax.block_until_ready(out)
    assert out.shape == (B, out_dim)
    assert jnp.allclose(out, ref, atol=2e-5, rtol=2e-5), "f32 mismatch vs reference"

    # bf16 matmul operands (v6e/v7x MXU fast path), f32 accumulation: looser check.
    out_bf16 = mlp_forward(x, w1, b1, gamma, beta, w2, b2,
                           matmul_dtype=jnp.bfloat16)
    out_bf16 = jax.block_until_ready(out_bf16)
    assert jnp.allclose(out_bf16, ref, atol=5e-2, rtol=5e-2), "bf16 mismatch vs reference"

    print("KERNEL_OK")
</pallas_src>

<mosaic_0001>
module attributes {stable_mosaic.version = 11 : i64} {
  func.func @_mlp_kernel(%arg0: i32, %arg1: memref<24x32xf32, #tpu.memory_space<vmem>>, %arg2: memref<32x128xf32, #tpu.memory_space<vmem>>, %arg3: memref<1x128xf32, #tpu.memory_space<vmem>>, %arg4: memref<1x128xf32, #tpu.memory_space<vmem>>, %arg5: memref<1x128xf32, #tpu.memory_space<vmem>>, %arg6: memref<128x128xf32, #tpu.memory_space<vmem>>, %arg7: memref<1x128xf32, #tpu.memory_space<vmem>>, %arg8: memref<24x128xf32, #tpu.memory_space<vmem>>) attributes {dimension_semantics = [#tpu.dimension_semantics<parallel>], iteration_bounds = array<i64: 1>, scalar_prefetch = 0 : i64, scratch_operands = 0 : i64, tpu.core_type = #tpu.core_type<tc>, window_params = [{transform_indices = @transform_0, window_bounds = array<i64: 24, 32>}, {pipeline_mode = #tpu.pipeline_mode<synchronous>, transform_indices = @transform_1, window_bounds = array<i64: 32, 128>}, {pipeline_mode = #tpu.pipeline_mode<synchronous>, transform_indices = @transform_2, window_bounds = array<i64: 1, 128>}, {pipeline_mode = #tpu.pipeline_mode<synchronous>, transform_indices = @transform_3, window_bounds = array<i64: 1, 128>}, {pipeline_mode = #tpu.pipeline_mode<synchronous>, transform_indices = @transform_4, window_bounds = array<i64: 1, 128>}, {pipeline_mode = #tpu.pipeline_mode<synchronous>, transform_indices = @transform_5, window_bounds = array<i64: 128, 128>}, {pipeline_mode = #tpu.pipeline_mode<synchronous>, transform_indices = @transform_6, window_bounds = array<i64: 1, 128>}, {transform_indices = @transform_7, window_bounds = array<i64: 24, 128>}]} {
    %c0 = arith.constant 0 : index
    %c0_0 = arith.constant 0 : index
    %0 = vector.load %arg1[%c0, %c0_0] : memref<24x32xf32, #tpu.memory_space<vmem>>, vector<24x32xf32>
    %c0_1 = arith.constant 0 : index
    %c0_2 = arith.constant 0 : index
    %1 = vector.load %arg2[%c0_1, %c0_2] : memref<32x128xf32, #tpu.memory_space<vmem>>, vector<32x128xf32>
    %cst = arith.constant dense<0.000000e+00> : vector<24x128xf32>
    %2 = tpu.matmul %0, %1, %cst {dimension_numbers = #tpu.dot_dimension_numbers<[1], [0], [0], [1], [0, 0, 1, 1], [], []>} : vector<24x32xf32>, vector<32x128xf32>, vector<24x128xf32> -> vector<24x128xf32>
    %c0_3 = arith.constant 0 : index
    %c0_4 = arith.constant 0 : index
    %3 = vector.load %arg3[%c0_3, %c0_4] : memref<1x128xf32, #tpu.memory_space<vmem>>, vector<1x128xf32>
    %4 = vector.broadcast %3 : vector<1x128xf32> to vector<24x128xf32>
    %5 = arith.addf %2, %4 : vector<24x128xf32>
    %6 = math.tanh %5 : vector<24x128xf32>
    %cst_5 = arith.constant dense<0.000000e+00> : vector<24xf32>
    %7 = vector.multi_reduction <add>, %6, %cst_5 [1] : vector<24x128xf32> to vector<24xf32>
    %8 = vector.shape_cast %7 : vector<24xf32> to vector<24x1xf32>
    %cst_6 = arith.constant 1.562500e-02 : f32
    %9 = vector.broadcast %cst_6 : f32 to vector<24x1xf32>
    %10 = arith.mulf %8, %9 : vector<24x1xf32>
    %11 = vector.broadcast %10 : vector<24x1xf32> to vector<24x128xf32>
    %12 = arith.subf %6, %11 : vector<24x128xf32>
    %13 = arith.mulf %12, %12 : vector<24x128xf32>
    %14 = tpu.iota {dimensions = array<i32: 1>} : vector<24x128xi32>
    %c64_i32 = arith.constant 64 : i32
    %15 = vector.broadcast %c64_i32 : i32 to vector<24x128xi32>
    %16 = arith.cmpi slt, %14, %15 : vector<24x128xi32>
    %cst_7 = arith.constant 0.000000e+00 : f32
    %17 = vector.broadcast %cst_7 : f32 to vector<24x128xf32>
    %18 = arith.select %16, %13, %17 : vector<24x128xi1>, vector<24x128xf32>
    %cst_8 = arith.constant dense<0.000000e+00> : vector<24xf32>
    %19 = vector.multi_reduction <add>, %18, %cst_8 [1] : vector<24x128xf32> to vector<24xf32>
    %20 = vector.shape_cast %19 : vector<24xf32> to vector<24x1xf32>
    %cst_9 = arith.constant 1.562500e-02 : f32
    %21 = vector.broadcast %cst_9 : f32 to vector<24x1xf32>
    %22 = arith.mulf %20, %21 : vector<24x1xf32>
    %cst_10 = arith.constant 9.99999974E-6 : f32
    %23 = vector.broadcast %cst_10 : f32 to vector<24x1xf32>
    %24 = arith.addf %22, %23 : vector<24x1xf32>
    %25 = math.rsqrt %24 : vector<24x1xf32>
    %26 = vector.broadcast %25 : vector<24x1xf32> to vector<24x128xf32>
    %27 = arith.mulf %12, %26 : vector<24x128xf32>
    %c0_11 = arith.constant 0 : index
    %c0_12 = arith.constant 0 : index
    %28 = vector.load %arg4[%c0_11, %c0_12] : memref<1x128xf32, #tpu.memory_space<vmem>>, vector<1x128xf32>
    %29 = vector.broadcast %28 : vector<1x128xf32> to vector<24x128xf32>
    %30 = arith.mulf %27, %29 : vector<24x128xf32>
    %c0_13 = arith.constant 0 : index
    %c0_14 = arith.constant 0 : index
    %31 = vector.load %arg5[%c0_13, %c0_14] : memref<1x128xf32, #tpu.memory_space<vmem>>, vector<1x128xf32>
    %32 = vector.broadcast %31 : vector<1x128xf32> to vector<24x128xf32>
    %33 = arith.addf %30, %32 : vector<24x128xf32>
    %c0_15 = arith.constant 0 : index
    %c0_16 = arith.constant 0 : index
    %34 = vector.load %arg6[%c0_15, %c0_16] : memref<128x128xf32, #tpu.memory_space<vmem>>, vector<128x128xf32>
    %cst_17 = arith.constant dense<0.000000e+00> : vector<24x128xf32>
    %35 = tpu.matmul %33, %34, %cst_17 {dimension_numbers = #tpu.dot_dimension_numbers<[1], [0], [0], [1], [0, 0, 1, 1], [], []>} : vector<24x128xf32>, vector<128x128xf32>, vector<24x128xf32> -> vector<24x128xf32>
    %c0_18 = arith.constant 0 : index
    %c0_19 = arith.constant 0 : index
    %36 = vector.load %arg7[%c0_18, %c0_19] : memref<1x128xf32, #tpu.memory_space<vmem>>, vector<1x128xf32>
    %37 = vector.broadcast %36 : vector<1x128xf32> to vector<24x128xf32>
    %38 = arith.addf %35, %37 : vector<24x128xf32>
    %c0_20 = arith.constant 0 : index
    %c0_21 = arith.constant 0 : index
    %39 = vector.load %arg8[%c0_20, %c0_21] : memref<24x128xf32, #tpu.memory_space<vmem>>, vector<24x128xf32>
    tpu.vector_store %arg8[%c0_20, %c0_21], %38 {strides = array<i32>} : memref<24x128xf32, #tpu.memory_space<vmem>>, vector<24x128xf32>,
    return
  }
  func.func @transform_0(%arg0: i32) -> (i32, i32) {
    %c0_i32 = arith.constant 0 : i32
    %c0_i32_0 = arith.constant 0 : i32
    return %arg0, %c0_i32 : i32, i32
  }
  func.func @transform_1(%arg0: i32) -> (i32, i32) {
    %c0_i32 = arith.constant 0 : i32
    %c0_i32_0 = arith.constant 0 : i32
    %c0_i32_1 = arith.constant 0 : i32
    return %c0_i32, %c0_i32_0 : i32, i32
  }
  func.func @transform_2(%arg0: i32) -> (i32, i32) {
    %c0_i32 = arith.constant 0 : i32
    %c0_i32_0 = arith.constant 0 : i32
    %c0_i32_1 = arith.constant 0 : i32
    return %c0_i32, %c0_i32_0 : i32, i32
  }
  func.func @transform_3(%arg0: i32) -> (i32, i32) {
    %c0_i32 = arith.constant 0 : i32
    %c0_i32_0 = arith.constant 0 : i32
    %c0_i32_1 = arith.constant 0 : i32
    return %c0_i32, %c0_i32_0 : i32, i32
  }
  func.func @transform_4(%arg0: i32) -> (i32, i32) {
    %c0_i32 = arith.constant 0 : i32
    %c0_i32_0 = arith.constant 0 : i32
    %c0_i32_1 = arith.constant 0 : i32
    return %c0_i32, %c0_i32_0 : i32, i32
  }
  func.func @transform_5(%arg0: i32) -> (i32, i32) {
    %c0_i32 = arith.constant 0 : i32
    %c0_i32_0 = arith.constant 0 : i32
    %c0_i32_1 = arith.constant 0 : i32
    return %c0_i32, %c0_i32_0 : i32, i32
  }
  func.func @transform_6(%arg0: i32) -> (i32, i32) {
    %c0_i32 = arith.constant 0 : i32
    %c0_i32_0 = arith.constant 0 : i32
    %c0_i32_1 = arith.constant 0 : i32
    return %c0_i32, %c0_i32_0 : i32, i32
  }
  func.func @transform_7(%arg0: i32) -> (i32, i32) {
    %c0_i32 = arith.constant 0 : i32
    %c0_i32_0 = arith.constant 0 : i32
    return %arg0, %c0_i32 : i32, i32
  }
}

</mosaic_0001>

<llo_original>
// kernel: mlp_forward.1
$region0: #{mlp_forward.1}
  #allocation0 [shape = 'u32[]', space=smem, size = 0x4, offset = 0x4, fixed_abs, tag = 'smem constant byte address 0x4 - core index']
  #allocation1 [shape = 'u32[144,128]{1,0:T(1,128)}', space=vmem, size = 0x12000, scoped, tag = 'internal scratch']
  %s0 = inlined_call_operand.vmem [shape: f32[24,32], index: 0, kind: input, shape index: {}]
  %s1 = inlined_call_operand.vmem [shape: f32[32,128], index: 1, kind: input, shape index: {}]
  %s2 = inlined_call_operand.vmem [shape: f32[1,128], index: 2, kind: input, shape index: {}]
  %s3 = inlined_call_operand.vmem [shape: f32[1,128], index: 3, kind: input, shape index: {}]
  %s4 = inlined_call_operand.vmem [shape: f32[1,128], index: 4, kind: input, shape index: {}]
  %s5 = inlined_call_operand.vmem [shape: f32[128,128], index: 5, kind: input, shape index: {}]
  %s6 = inlined_call_operand.vmem [shape: f32[1,128], index: 6, kind: input, shape index: {}]
  %s7 = inlined_call_operand.vmem [shape: f32[24,128], index: 7, kind: output, shape index: {}]
  %s8 = sld [smem:[#allocation0]]
  $region38: #{mlp_forward.1} parent=0
    _
  %s10 = ssub.s32 1, %s8
  %s11 = scalar_select 0, %s10, %s8
  // Predicated region
  $region2: #{mlp_forward.1} parent=0 // pred_check
    _
  $region3: #{mlp_forward.1} parent=0 // pred_check_branch
    %13 = sbr.rel (0) target = $region5
  $region4: #{mlp_forward.1} parent=0 // pred_region
    _
  $region5: #{mlp_forward.1} parent=0 // pred_fallthru
    _
  // Predicated region
  $region6: #{mlp_forward.1} parent=0 // pred_check
    _
  $region7: #{mlp_forward.1} parent=0 // pred_check_branch
    %15 = sbr.rel (0) target = $region9
  $region8: #{mlp_forward.1} parent=0 // pred_region
    _
  $region9: #{mlp_forward.1} parent=0 // pred_fallthru
    _
  // Predicated region
  $region10: #{mlp_forward.1} parent=0 // pred_check
    _
  $region11: #{mlp_forward.1} parent=0 // pred_check_branch
    %17 = sbr.rel (0) target = $region13
  $region12: #{mlp_forward.1} parent=0 // pred_region
    _
  $region13: #{mlp_forward.1} parent=0 // pred_fallthru
    _
  // Predicated region
  $region14: #{mlp_forward.1} parent=0 // pred_check
    _
  $region15: #{mlp_forward.1} parent=0 // pred_check_branch
    %19 = sbr.rel (0) target = $region17
  $region16: #{mlp_forward.1} parent=0 // pred_region
    _
  $region17: #{mlp_forward.1} parent=0 // pred_fallthru
    _
  // Predicated region
  $region18: #{mlp_forward.1} parent=0 // pred_check
    _
  $region19: #{mlp_forward.1} parent=0 // pred_check_branch
    %21 = sbr.rel (0) target = $region21
  $region20: #{mlp_forward.1} parent=0 // pred_region
    _
  $region21: #{mlp_forward.1} parent=0 // pred_fallthru
    _
  // Predicated region
  $region22: #{mlp_forward.1} parent=0 // pred_check
    _
  $region23: #{mlp_forward.1} parent=0 // pred_check_branch
    %23 = sbr.rel (0) target = $region25
  $region24: #{mlp_forward.1} parent=0 // pred_region
    _
  $region25: #{mlp_forward.1} parent=0 // pred_fallthru
    _
  // Predicated region
  $region26: #{mlp_forward.1} parent=0 // pred_check
    _
  $region27: #{mlp_forward.1} parent=0 // pred_check_branch
    %25 = sbr.rel (0) target = $region29
  $region28: #{mlp_forward.1} parent=0 // pred_region
    _
  $region29: #{mlp_forward.1} parent=0 // pred_fallthru
    _
  %v26 = vld [vmem:[%s0] sm:$0xff]
  %v27 = vld [vmem:[%s0 + $0x8] sm:$0xff]
  %v28 = vld [vmem:[%s0 + $0x10] sm:$0xff]
  %v29 = vld [vmem:[%s1] sm:$0xff]
  %v30 = vld [vmem:[%s1 + $0x8] sm:$0xff]
  %v31 = vld [vmem:[%s1 + $0x10] sm:$0xff]
  %v32 = vld [vmem:[%s1 + $0x18] sm:$0xff]
  %v33 = vld [vmem:[%s2] sm:$0x1]
  %v35 = vlaneseq
  %v36 = vshrl.u32 %v35, 7
  %v37 = vsub.s32 0, %v36
  %v38 = vrot.slane %v33, %v37
  %vm40 = vcmask 261120
  %v42 = vsel %vm40, %v26, 0
  %v45 = vsel %vm40, %v27, 0
  %v48 = vsel %vm40, %v28, 0
  %50 = vmatprep.subr.mxu0 0.0
  %51 = vmatpush1.msra.mxu0 %v29
  %52 = vmatprep.subr.mxu0 0.0
  %53 = vmatpush1.msra.mxu0 %v30
  %54 = vmatprep.subr.mxu0 0.0
  %55 = vmatpush1.msra.mxu0 %v31
  %56 = vmatprep.subr.mxu0 0.0
  %57 = vmatpush1.msra.mxu0 %v32
  %58 = vmatprep.subr.mxu0 0.0
  %59 = vmatpush1.msra.mxu0 0.0
  %60 = vmatprep.subr.mxu0 0.0
  %61 = vmatpush1.msra.mxu0 0.0
  %62 = vmatprep.subr.mxu0 0.0
  %63 = vmatpush1.msra.mxu0 0.0
  %64 = vmatprep.subr.mxu0 0.0
  %65 = vmatpush1.msra.mxu0 0.0
  %66 = vmatprep.subr.mxu0 0.0
  %67 = vmatpush1.msra.mxu0 0.0
  %68 = vmatprep.subr.mxu0 0.0
  %69 = vmatpush1.msra.mxu0 0.0
  %70 = vmatprep.subr.mxu0 0.0
  %71 = vmatpush1.msra.mxu0 0.0
  %72 = vmatprep.subr.mxu0 0.0
  %73 = vmatpush1.msra.mxu0 0.0
  %74 = vmatprep.subr.mxu0 0.0
  %75 = vmatpush1.msra.mxu0 0.0
  %76 = vmatprep.subr.mxu0 0.0
  %77 = vmatpush1.msra.mxu0 0.0
  %78 = vmatprep.subr.mxu0 0.0
  %79 = vmatpush1.msra.mxu0 0.0
  %80 = vmatprep.subr.mxu0 0.0
  %81 = vmatpush1.msra.mxu0 0.0
  %82 = vmatprep.subr.mxu0 0.0
  %83 = vmatpush1.msra.mxu0 0.0
  %84 = vmatprep.subr.mxu0 0.0
  %85 = vmatpush1.msra.mxu0 0.0
  %86 = vmatprep.subr.mxu0 0.0
  %87 = vmatpush1.msra.mxu0 0.0
  %88 = vmatprep.subr.mxu0 0.0
  %89 = vmatpush1.msra.mxu0 0.0
  %90 = vmatprep.subr.mxu0 0.0
  %91 = vmatpush1.msra.mxu0 0.0
  %92 = vmatprep.subr.mxu0 0.0
  %93 = vmatpush1.msra.mxu0 0.0
  %94 = vmatprep.subr.mxu0 0.0
  %95 = vmatpush1.msra.mxu0 0.0
  %96 = vmatprep.subr.mxu0 0.0
  %97 = vmatpush1.msra.mxu0 0.0
  %98 = vmatprep.subr.mxu0 0.0
  %99 = vmatpush1.msra.mxu0 0.0
  %100 = vmatprep.subr.mxu0 0.0
  %101 = vmatpush1.msra.mxu0 0.0
  %102 = vmatprep.subr.mxu0 0.0
  %103 = vmatpush1.msra.mxu0 0.0
  %104 = vmatprep.subr.mxu0 0.0
  %105 = vmatpush1.msra.mxu0 0.0
  %106 = vmatprep.subr.mxu0 0.0
  %107 = vmatpush1.msra.mxu0 0.0
  %108 = vmatprep.subr.mxu0 0.0
  %109 = vmatpush1.msra.mxu0 0.0
  %110 = vmatprep.subr.mxu0 0.0
  %111 = vmatpush1.msra.mxu0 0.0
  %112 = vmatprep.subr.mxu0 0.0
  %113 = vmatpush1.msra.mxu0 0.0
  %114 = vmatprep.mubr.f32.mxu0 0.0
  %115 = vmatmul.mubr.f32.gmra.mrb[0].mxu0 %v42
  %v116 = vpop.f32.mrb[0].mxu0
  %v117 = vadd.f32 %v38, %v116
  %v118 = vpop.f32.mrb[0].mxu0
  %119 = vmatprep.mubr.f32.mxu0 0.0
  %120 = vmatmul.mubr.f32.gmra.mrb[0].mxu0 %v45
  %v121 = vpop.f32.mrb[0].mxu0
  %v122 = vadd.f32 %v38, %v121
  %v123 = vpop.f32.mrb[0].mxu0
  %124 = vmatprep.mubr.f32.mxu0 0.0
  %125 = vmatmul.mubr.f32.gmra.mrb[0].mxu0 %v48
  %v126 = vpop.f32.mrb[0].mxu0
  %v127 = vadd.f32 %v38, %v126
  %v128 = vpop.f32.mrb[0].mxu0
  %129 = vdwg.mxu0
  %v130 = vtanh.pop %v117
  %v131 = vtanh.pop %v122
  %v132 = vtanh.pop %v127
  %133 = vadd.xlane.f32.xlu0 %v130
  %v134 = vpop.xlane.xlu0 %133
  %135 = vadd.xlane.f32.xlu0 %v131
  %v136 = vpop.xlane.xlu0 %135
  %137 = vadd.xlane.f32.xlu0 %v132
  %v138 = vpop.xlane.xlu0 %137
  %v139 = vmul.f32 %v134, 0.015625
  %v140 = vmul.f32 %v136, 0.015625
  %v141 = vmul.f32 %v138, 0.015625
  %v142 = vsub.f32 %v130, %v139
  %v143 = vsub.f32 %v131, %v140
  %v144 = vsub.f32 %v132, %v141
  %v145 = vmul.f32 %v142, %v142
  %v146 = vmul.f32 %v143, %v143
  %v147 = vmul.f32 %v144, %v144
  %v148 = vlaneseq
  %v149 = vand.u32 %v148, 127
  %vm150 = vcmp.lt.s32.totalorder %v149, 64
  %v151 = vsel %vm150, %v145, 0.0
  %v152 = vsel %vm150, %v146, 0.0
  %v153 = vsel %vm150, %v147, 0.0
  %154 = vadd.xlane.f32.xlu0 %v151
  %v155 = vpop.xlane.xlu0 %154
  %156 = vadd.xlane.f32.xlu0 %v152
  %v157 = vpop.xlane.xlu0 %156
  %158 = vadd.xlane.f32.xlu0 %v153
  %v159 = vpop.xlane.xlu0 %158
  %v160 = vmul.f32 %v155, 0.015625
  %v161 = vmul.f32 %v157, 0.015625
  %v162 = vmul.f32 %v159, 0.015625
  %v163 = vadd.f32 %v160, 1e-05
  %v164 = vadd.f32 %v161, 1e-05
  %v165 = vadd.f32 %v162, 1e-05
  %v166 = vrsqrt.pop %v163
  %v167 = vrsqrt.pop %v164
  %v168 = vrsqrt.pop %v165
  %v169 = vmul.f32 %v142, %v166
  %v170 = vmul.f32 %v143, %v167
  %v171 = vmul.f32 %v144, %v168
  %v172 = vld [vmem:[%s3] sm:$0x1]
  %v174 = vlaneseq
  %v175 = vshrl.u32 %v174, 7
  %v176 = vsub.s32 0, %v175
  %v177 = vrot.slane %v172, %v176
  %v179 = vmul.f32 %v169, %v177
  %v180 = vmul.f32 %v170, %v177
  %v181 = vmul.f32 %v171, %v177
  %v182 = vld [vmem:[%s4] sm:$0x1]
  %v184 = vlaneseq
  %v185 = vshrl.u32 %v184, 7
  %v186 = vsub.s32 0, %v185
  %v187 = vrot.slane %v182, %v186
  %v189 = vadd.f32 %v179, %v187
  %v190 = vadd.f32 %v180, %v187
  %v191 = vadd.f32 %v181, %v187
  %v192 = vld [vmem:[%s5] sm:$0xff]
  %v193 = vld [vmem:[%s5 + $0x8] sm:$0xff]
  %v194 = vld [vmem:[%s5 + $0x10] sm:$0xff]
  %v195 = vld [vmem:[%s5 + $0x18] sm:$0xff]
  %v196 = vld [vmem:[%s5 + $0x20] sm:$0xff]
  %v197 = vld [vmem:[%s5 + $0x28] sm:$0xff]
  %v198 = vld [vmem:[%s5 + $0x30] sm:$0xff]
  %v199 = vld [vmem:[%s5 + $0x38] sm:$0xff]
  %v200 = vld [vmem:[%s5 + $0x40] sm:$0xff]
  %v201 = vld [vmem:[%s5 + $0x48] sm:$0xff]
  %v202 = vld [vmem:[%s5 + $0x50] sm:$0xff]
  %v203 = vld [vmem:[%s5 + $0x58] sm:$0xff]
  %v204 = vld [vmem:[%s5 + $0x60] sm:$0xff]
  %v205 = vld [vmem:[%s5 + $0x68] sm:$0xff]
  %v206 = vld [vmem:[%s5 + $0x70] sm:$0xff]
  %v207 = vld [vmem:[%s5 + $0x78] sm:$0xff]
  %v208 = vld [vmem:[%s6] sm:$0x1]
  %v210 = vlaneseq
  %v211 = vshrl.u32 %v210, 7
  %v212 = vsub.s32 0, %v211
  %v213 = vrot.slane %v208, %v212
  %215 = vmatprep.subr.mxu0 0.0
  %216 = vmatpush1.msra.mxu0 %v192
  %217 = vmatprep.subr.mxu0 0.0
  %218 = vmatpush1.msra.mxu0 %v193
  %219 = vmatprep.subr.mxu0 0.0
  %220 = vmatpush1.msra.mxu0 %v194
  %221 = vmatprep.subr.mxu0 0.0
  %222 = vmatpush1.msra.mxu0 %v195
  %223 = vmatprep.subr.mxu0 0.0
  %224 = vmatpush1.msra.mxu0 %v196
  %225 = vmatprep.subr.mxu0 0.0
  %226 = vmatpush1.msra.mxu0 %v197
  %227 = vmatprep.subr.mxu0 0.0
  %228 = vmatpush1.msra.mxu0 %v198
  %229 = vmatprep.subr.mxu0 0.0
  %230 = vmatpush1.msra.mxu0 %v199
  %231 = vmatprep.subr.mxu0 0.0
  %232 = vmatpush1.msra.mxu0 %v200
  %233 = vmatprep.subr.mxu0 0.0
  %234 = vmatpush1.msra.mxu0 %v201
  %235 = vmatprep.subr.mxu0 0.0
  %236 = vmatpush1.msra.mxu0 %v202
  %237 = vmatprep.subr.mxu0 0.0
  %238 = vmatpush1.msra.mxu0 %v203
  %239 = vmatprep.subr.mxu0 0.0
  %240 = vmatpush1.msra.mxu0 %v204
  %241 = vmatprep.subr.mxu0 0.0
  %242 = vmatpush1.msra.mxu0 %v205
  %243 = vmatprep.subr.mxu0 0.0
  %244 = vmatpush1.msra.mxu0 %v206
  %245 = vmatprep.subr.mxu0 0.0
  %246 = vmatpush1.msra.mxu0 %v207
  %247 = vmatprep.subr.mxu0 0.0
  %248 = vmatpush1.msra.mxu0 0.0
  %249 = vmatprep.subr.mxu0 0.0
  %250 = vmatpush1.msra.mxu0 0.0
  %251 = vmatprep.subr.mxu0 0.0
  %252 = vmatpush1.msra.mxu0 0.0
  %253 = vmatprep.subr.mxu0 0.0
  %254 = vmatpush1.msra.mxu0 0.0
  %255 = vmatprep.subr.mxu0 0.0
  %256 = vmatpush1.msra.mxu0 0.0
  %257 = vmatprep.subr.mxu0 0.0
  %258 = vmatpush1.msra.mxu0 0.0
  %259 = vmatprep.subr.mxu0 0.0
  %260 = vmatpush1.msra.mxu0 0.0
  %261 = vmatprep.subr.mxu0 0.0
  %262 = vmatpush1.msra.mxu0 0.0
  %263 = vmatprep.subr.mxu0 0.0
  %264 = vmatpush1.msra.mxu0 0.0
  %265 = vmatprep.subr.mxu0 0.0
  %266 = vmatpush1.msra.mxu0 0.0
  %267 = vmatprep.subr.mxu0 0.0
  %268 = vmatpush1.msra.mxu0 0.0
  %269 = vmatprep.subr.mxu0 0.0
  %270 = vmatpush1.msra.mxu0 0.0
  %271 = vmatprep.subr.mxu0 0.0
  %272 = vmatpush1.msra.mxu0 0.0
  %273 = vmatprep.subr.mxu0 0.0
  %274 = vmatpush1.msra.mxu0 0.0
  %275 = vmatprep.subr.mxu0 0.0
  %276 = vmatpush1.msra.mxu0 0.0
  %277 = vmatprep.subr.mxu0 0.0
  %278 = vmatpush1.msra.mxu0 0.0
  %279 = vmatprep.mubr.f32.mxu0 0.0
  %280 = vmatmul.mubr.f32.gmra.mrb[0].mxu0 %v189
  %v281 = vpop.f32.mrb[0].mxu0
  %v282 = vadd.f32 %v213, %v281
  %v283 = vpop.f32.mrb[0].mxu0
  %284 = vmatprep.mubr.f32.mxu0 0.0
  %285 = vmatmul.mubr.f32.gmra.mrb[0].mxu0 %v190
  %v286 = vpop.f32.mrb[0].mxu0
  %v287 = vadd.f32 %v213, %v286
  %v288 = vpop.f32.mrb[0].mxu0
  %289 = vmatprep.mubr.f32.mxu0 0.0
  %290 = vmatmul.mubr.f32.gmra.mrb[0].mxu0 %v191
  %v291 = vpop.f32.mrb[0].mxu0
  %v292 = vadd.f32 %v213, %v291
  %v293 = vpop.f32.mrb[0].mxu0
  %294 = vdwg.mxu0
  %295 = vst [vmem:[%s7] sm:$0xff] %v282
  %296 = vst [vmem:[%s7 + $0x8] sm:$0xff] %v287
  %297 = vst [vmem:[%s7 + $0x10] sm:$0xff] %v292
  // Predicated region
  $region30: #{mlp_forward.1} parent=0 // pred_check
    _
  $region31: #{mlp_forward.1} parent=0 // pred_check_branch
    %299 = sbr.rel (0) target = $region33
  $region32: #{mlp_forward.1} parent=0 // pred_region
    _
  $region33: #{mlp_forward.1} parent=0 // pred_fallthru
    _
  // Predicated region
  $region34: #{mlp_forward.1} parent=0 // pred_check
    _
  $region35: #{mlp_forward.1} parent=0 // pred_check_branch
    %301 = sbr.rel (0) target = $region37
  $region36: #{mlp_forward.1} parent=0 // pred_region
    _
  $region37: #{mlp_forward.1} parent=0 // pred_fallthru
    _

</llo_original>
